<compile_context>
chip_gen: v7x
topology: tpu7x:2x2x1
jax: 0.10.0
libtpu: 0.0.40
codegen_flags: <defaults>
</compile_context>

<pallas_src>
import functools

import jax
import jax.numpy as jnp
from jax import lax
from jax.experimental import pallas as pl
from jax.experimental.pallas import tpu as pltpu


def _round_up(x, m):
    return (x + m - 1) // m * m


def _contrastive_loss_kernel(zi_ref, zj_ref, out_ref,
                             scale_i_ref, m_ref, l_ref, diag_ref,
                             *, inv_temperature, valid_cols, block_rows, mask_cols):
    qi = pl.program_id(0)
    kj = pl.program_id(1)

    zi = zi_ref[...]                                   # (T, Dp) raw, native dtype
    zj = zj_ref[...]                                   # (T, Dp) raw, native dtype

    # Normalize the z_j tile (f32 math, cast back so the MXU sees the native dtype).
    zjf = zj.astype(jnp.float32)
    scale_j = lax.rsqrt(jnp.maximum(jnp.sum(zjf * zjf, axis=-1, keepdims=True), 1e-24))
    zjn = (zjf * scale_j).astype(zj.dtype)

    @pl.when(kj == 0)
    def _init():
        zif = zi.astype(jnp.float32)
        sumsq_i = jnp.sum(zif * zif, axis=-1, keepdims=True)
        # rsqrt(max(sumsq, eps^2)) == 1 / max(||x||, 1e-12)  (PyTorch eps behavior),
        # with 1/temperature folded into the per-row scale.
        scale_i_ref[...] = lax.rsqrt(jnp.maximum(sumsq_i, 1e-24)) * inv_temperature
        m_ref[...] = jnp.full_like(m_ref, -1e30)
        l_ref[...] = jnp.zeros_like(l_ref)
        diag_ref[...] = jnp.zeros_like(diag_ref)

    # Logits tile on the MXU: contract last dims of both operands (no explicit .T),
    # then apply the per-row scale (inverse norm of z_i and 1/temperature).
    s = lax.dot_general(zi, zjn, (((1,), (1,)), ((), ())),
                        preferred_element_type=jnp.float32)
    s = s * scale_i_ref[...]                           # (T, T) * (T, 1)

    # Target logit: the diagonal lives only in the kj == qi block; extract it from
    # the logits tile we already computed (reuses the MXU result).
    @pl.when(kj == qi)
    def _diag():
        r = lax.broadcasted_iota(jnp.int32, s.shape, 0)
        c = lax.broadcasted_iota(jnp.int32, s.shape, 1)
        diag_ref[...] = jnp.sum(jnp.where(r == c, s, 0.0), axis=-1, keepdims=True)

    if mask_cols:
        col_ids = kj * block_rows + lax.broadcasted_iota(jnp.int32, s.shape, 1)
        s = jnp.where(col_ids < valid_cols, s, -1e30)  # padded key rows -> -inf-ish

    # Online logsumexp update.
    m_prev = m_ref[...]
    m_new = jnp.maximum(m_prev, jnp.max(s, axis=-1, keepdims=True))
    alpha = jnp.exp(m_prev - m_new)
    p = jnp.exp(s - m_new)
    l_ref[...] = alpha * l_ref[...] + jnp.sum(p, axis=-1, keepdims=True)
    m_ref[...] = m_new

    @pl.when(kj == pl.num_programs(1) - 1)
    def _finalize():
        out_ref[...] = m_ref[...] + jnp.log(l_ref[...]) - diag_ref[...]


def contrastive_loss(z_i, z_j, temperature=0.5, block_rows=128):
    B, D = z_i.shape
    assert z_j.shape == (B, D)

    # Tile/pad so blocks are (8,128)-legal and lane-dense.  128-row tiles are
    # MXU-aligned on all generations (v5e 4x128^2, v6e/v7x 2x256^2).
    T = min(block_rows, _round_up(B, 8))
    B_pad = _round_up(B, T)
    D_pad = _round_up(D, 128)

    zi_p = jnp.pad(z_i, ((0, B_pad - B), (0, D_pad - D))) if (B_pad != B or D_pad != D) else z_i
    zj_p = jnp.pad(z_j, ((0, B_pad - B), (0, D_pad - D))) if (B_pad != B or D_pad != D) else z_j

    n_row_tiles = B_pad // T
    kernel = functools.partial(
        _contrastive_loss_kernel,
        inv_temperature=float(1.0 / temperature),
        valid_cols=B,
        block_rows=T,
        mask_cols=(B_pad != B),
    )

    grid_spec = pltpu.PrefetchScalarGridSpec(
        num_scalar_prefetch=0,
        grid=(n_row_tiles, n_row_tiles),              # (query tiles, key/reduction tiles)
        in_specs=[
            pl.BlockSpec((T, D_pad), lambda i, k: (i, 0)),   # z_i tile (resident over k)
            pl.BlockSpec((T, D_pad), lambda i, k: (k, 0)),   # z_j tile
        ],
        out_specs=pl.BlockSpec((T, 1), lambda i, k: (i, 0)),  # per-row loss, one write at k==last
        scratch_shapes=[pltpu.VMEM((T, 1), jnp.float32)] * 4,  # scale_i, m, l, diag
    )

    itemsize = jnp.dtype(z_i.dtype).itemsize
    per_row = pl.pallas_call(
        kernel,
        out_shape=jax.ShapeDtypeStruct((B_pad, 1), jnp.float32),
        grid_spec=grid_spec,
        compiler_params=pltpu.CompilerParams(
            dimension_semantics=("parallel", "arbitrary"),
            vmem_limit_bytes=32 * 1024 * 1024,
        ),
        cost_estimate=pl.CostEstimate(
            flops=int(2 * B_pad * B_pad * D_pad),
            transcendentals=int(B_pad * B_pad),
            bytes_accessed=int(2 * B_pad * D_pad * itemsize + B_pad * 4),
        ),
    )(zi_p, zj_p)

    # Tiny final reduction (mean over the B real rows) stays in JAX so the row
    # grid axis can be sharded across TensorCores without cross-core accumulation.
    return jnp.mean(per_row[:B, 0])


def _reference_loss(z_i, z_j, temperature=0.5):
    zi = z_i / jnp.maximum(jnp.linalg.norm(z_i, axis=-1, keepdims=True), 1e-12)
    zj = z_j / jnp.maximum(jnp.linalg.norm(z_j, axis=-1, keepdims=True), 1e-12)
    sim = zi @ zj.T / temperature
    lse = jax.scipy.special.logsumexp(sim, axis=-1)
    diag = jnp.diagonal(sim)
    return jnp.mean(lse - diag)


if __name__ == "__main__":
    key = jax.random.PRNGKey(0)
    k1, k2, k3, k4 = jax.random.split(key, 4)

    # Small shape matching the module's typical use (batch=8, hidden=32).
    B, D = 8, 32
    z_i = jax.random.normal(k1, (B, D), dtype=jnp.float32)
    z_j = jax.random.normal(k2, (B, D), dtype=jnp.float32)
    loss = jax.block_until_ready(contrastive_loss(z_i, z_j, temperature=0.5))
    ref = _reference_loss(z_i, z_j, temperature=0.5)
    assert jnp.allclose(loss, ref, atol=1e-4, rtol=1e-4), (loss, ref)

    # Second small case exercising the multi-tile grid, online logsumexp, the
    # off-diagonal target extraction and padded-column masking
    # (B=40 padded to 48 with 16-row tiles, 3x3 grid).
    B2, D2 = 40, 96
    z_i2 = jax.random.normal(k3, (B2, D2), dtype=jnp.float32)
    z_j2 = jax.random.normal(k4, (B2, D2), dtype=jnp.float32)
    loss2 = jax.block_until_ready(contrastive_loss(z_i2, z_j2, temperature=0.5,
                                                   block_rows=16))
    ref2 = _reference_loss(z_i2, z_j2, temperature=0.5)
    assert jnp.allclose(loss2, ref2, atol=1e-4, rtol=1e-4), (loss2, ref2)

    print("KERNEL_OK")
</pallas_src>

<mosaic_0001>
module attributes {stable_mosaic.version = 11 : i64} {
  func.func @_contrastive_loss_kernel(%arg0: i32, %arg1: i32, %arg2: memref<8x128xf32, #tpu.memory_space<vmem>>, %arg3: memref<8x128xf32, #tpu.memory_space<vmem>>, %arg4: memref<8x1xf32, #tpu.memory_space<vmem>>, %arg5: memref<8x1xf32, #tpu.memory_space<vmem>>, %arg6: memref<8x1xf32, #tpu.memory_space<vmem>>, %arg7: memref<8x1xf32, #tpu.memory_space<vmem>>, %arg8: memref<8x1xf32, #tpu.memory_space<vmem>>) attributes {dimension_semantics = [#tpu.dimension_semantics<parallel>, #tpu.dimension_semantics<arbitrary>], iteration_bounds = array<i64: 1, 1>, scalar_prefetch = 0 : i64, scratch_operands = 4 : i64, tpu.core_type = #tpu.core_type<tc>, window_params = [{transform_indices = @transform_0, window_bounds = array<i64: 8, 128>}, {transform_indices = @transform_1, window_bounds = array<i64: 8, 128>}, {transform_indices = @transform_2, window_bounds = array<i64: 8, 1>}]} {
    %c0 = arith.constant 0 : index
    %c0_0 = arith.constant 0 : index
    %0 = vector.load %arg2[%c0, %c0_0] : memref<8x128xf32, #tpu.memory_space<vmem>>, vector<8x128xf32>
    %c0_1 = arith.constant 0 : index
    %c0_2 = arith.constant 0 : index
    %1 = vector.load %arg3[%c0_1, %c0_2] : memref<8x128xf32, #tpu.memory_space<vmem>>, vector<8x128xf32>
    %2 = arith.mulf %1, %1 : vector<8x128xf32>
    %cst = arith.constant dense<0.000000e+00> : vector<8xf32>
    %3 = vector.multi_reduction <add>, %2, %cst [1] : vector<8x128xf32> to vector<8xf32>
    %4 = vector.shape_cast %3 : vector<8xf32> to vector<8x1xf32>
    %cst_3 = arith.constant 1.000000e-24 : f32
    %5 = vector.broadcast %cst_3 : f32 to vector<8x1xf32>
    %6 = arith.maximumf %4, %5 : vector<8x1xf32>
    %7 = math.rsqrt %6 : vector<8x1xf32>
    %8 = vector.broadcast %7 : vector<8x1xf32> to vector<8x128xf32>
    %9 = arith.mulf %1, %8 : vector<8x128xf32>
    %c0_i32 = arith.constant 0 : i32
    %10 = arith.cmpi eq, %arg1, %c0_i32 : i32
    %11 = arith.extui %10 : i1 to i32
    %c0_i32_4 = arith.constant 0 : i32
    %12 = arith.cmpi ne, %11, %c0_i32_4 : i32
    scf.if %12 {
      %39 = arith.mulf %0, %0 : vector<8x128xf32>
      %cst_21 = arith.constant dense<0.000000e+00> : vector<8xf32>
      %40 = vector.multi_reduction <add>, %39, %cst_21 [1] : vector<8x128xf32> to vector<8xf32>
      %41 = vector.shape_cast %40 : vector<8xf32> to vector<8x1xf32>
      %cst_22 = arith.constant 1.000000e-24 : f32
      %42 = vector.broadcast %cst_22 : f32 to vector<8x1xf32>
      %43 = arith.maximumf %41, %42 : vector<8x1xf32>
      %44 = math.rsqrt %43 : vector<8x1xf32>
      %cst_23 = arith.constant 2.000000e+00 : f32
      %45 = vector.broadcast %cst_23 : f32 to vector<8x1xf32>
      %46 = arith.mulf %44, %45 : vector<8x1xf32>
      %c0_24 = arith.constant 0 : index
      %c0_25 = arith.constant 0 : index
      %47 = vector.load %arg5[%c0_24, %c0_25] : memref<8x1xf32, #tpu.memory_space<vmem>>, vector<8x1xf32>
      tpu.vector_store %arg5[%c0_24, %c0_25], %46 {strides = array<i32>} : memref<8x1xf32, #tpu.memory_space<vmem>>, vector<8x1xf32>,
      %cst_26 = arith.constant -1.000000e+30 : f32
      %48 = vector.broadcast %cst_26 : f32 to vector<8x1xf32>
      %c0_27 = arith.constant 0 : index
      %c0_28 = arith.constant 0 : index
      %49 = vector.load %arg6[%c0_27, %c0_28] : memref<8x1xf32, #tpu.memory_space<vmem>>, vector<8x1xf32>
      tpu.vector_store %arg6[%c0_27, %c0_28], %48 {strides = array<i32>} : memref<8x1xf32, #tpu.memory_space<vmem>>, vector<8x1xf32>,
      %cst_29 = arith.constant 0.000000e+00 : f32
      %50 = vector.broadcast %cst_29 : f32 to vector<8x1xf32>
      %c0_30 = arith.constant 0 : index
      %c0_31 = arith.constant 0 : index
      %51 = vector.load %arg7[%c0_30, %c0_31] : memref<8x1xf32, #tpu.memory_space<vmem>>, vector<8x1xf32>
      tpu.vector_store %arg7[%c0_30, %c0_31], %50 {strides = array<i32>} : memref<8x1xf32, #tpu.memory_space<vmem>>, vector<8x1xf32>,
      %cst_32 = arith.constant 0.000000e+00 : f32
      %52 = vector.broadcast %cst_32 : f32 to vector<8x1xf32>
      %c0_33 = arith.constant 0 : index
      %c0_34 = arith.constant 0 : index
      %53 = vector.load %arg8[%c0_33, %c0_34] : memref<8x1xf32, #tpu.memory_space<vmem>>, vector<8x1xf32>
      tpu.vector_store %arg8[%c0_33, %c0_34], %52 {strides = array<i32>} : memref<8x1xf32, #tpu.memory_space<vmem>>, vector<8x1xf32>,
    } else {
    }
    %cst_5 = arith.constant dense<0.000000e+00> : vector<8x8xf32>
    %13 = tpu.matmul %0, %9, %cst_5 {dimension_numbers = #tpu.dot_dimension_numbers<[1], [1], [0], [0], [0, 0, 1, 0], [], []>} : vector<8x128xf32>, vector<8x128xf32>, vector<8x8xf32> -> vector<8x8xf32>
    %c0_6 = arith.constant 0 : index
    %c0_7 = arith.constant 0 : index
    %14 = vector.load %arg5[%c0_6, %c0_7] : memref<8x1xf32, #tpu.memory_space<vmem>>, vector<8x1xf32>
    %15 = vector.broadcast %14 : vector<8x1xf32> to vector<8x8xf32>
    %16 = arith.mulf %13, %15 : vector<8x8xf32>
    %17 = arith.cmpi eq, %arg1, %arg0 : i32
    %18 = arith.extui %17 : i1 to i32
    %c0_i32_8 = arith.constant 0 : i32
    %19 = arith.cmpi ne, %18, %c0_i32_8 : i32
    scf.if %19 {
      %39 = tpu.iota {dimensions = array<i32: 0>} : vector<8x8xi32>
      %40 = tpu.iota {dimensions = array<i32: 1>} : vector<8x8xi32>
      %41 = arith.cmpi eq, %39, %40 : vector<8x8xi32>
      %cst_21 = arith.constant 0.000000e+00 : f32
      %42 = vector.broadcast %cst_21 : f32 to vector<8x8xf32>
      %43 = arith.select %41, %16, %42 : vector<8x8xi1>, vector<8x8xf32>
      %cst_22 = arith.constant dense<0.000000e+00> : vector<8xf32>
      %44 = vector.multi_reduction <add>, %43, %cst_22 [1] : vector<8x8xf32> to vector<8xf32>
      %45 = vector.shape_cast %44 : vector<8xf32> to vector<8x1xf32>
      %c0_23 = arith.constant 0 : index
      %c0_24 = arith.constant 0 : index
      %46 = vector.load %arg8[%c0_23, %c0_24] : memref<8x1xf32, #tpu.memory_space<vmem>>, vector<8x1xf32>
      tpu.vector_store %arg8[%c0_23, %c0_24], %45 {strides = array<i32>} : memref<8x1xf32, #tpu.memory_space<vmem>>, vector<8x1xf32>,
    } else {
    }
    %c0_9 = arith.constant 0 : index
    %c0_10 = arith.constant 0 : index
    %20 = vector.load %arg6[%c0_9, %c0_10] : memref<8x1xf32, #tpu.memory_space<vmem>>, vector<8x1xf32>
    %cst_11 = arith.constant dense<0xFF800000> : vector<8xf32>
    %21 = vector.multi_reduction <maximumf>, %16, %cst_11 [1] : vector<8x8xf32> to vector<8xf32>
    %22 = vector.shape_cast %21 : vector<8xf32> to vector<8x1xf32>
    %23 = arith.maximumf %20, %22 : vector<8x1xf32>
    %24 = arith.subf %20, %23 : vector<8x1xf32>
    %25 = math.exp %24 : vector<8x1xf32>
    %26 = vector.broadcast %23 : vector<8x1xf32> to vector<8x8xf32>
    %27 = arith.subf %16, %26 : vector<8x8xf32>
    %28 = math.exp %27 : vector<8x8xf32>
    %c0_12 = arith.constant 0 : index
    %c0_13 = arith.constant 0 : index
    %29 = vector.load %arg7[%c0_12, %c0_13] : memref<8x1xf32, #tpu.memory_space<vmem>>, vector<8x1xf32>
    %30 = arith.mulf %25, %29 : vector<8x1xf32>
    %cst_14 = arith.constant dense<0.000000e+00> : vector<8xf32>
    %31 = vector.multi_reduction <add>, %28, %cst_14 [1] : vector<8x8xf32> to vector<8xf32>
    %32 = vector.shape_cast %31 : vector<8xf32> to vector<8x1xf32>
    %33 = arith.addf %30, %32 : vector<8x1xf32>
    %c0_15 = arith.constant 0 : index
    %c0_16 = arith.constant 0 : index
    %34 = vector.load %arg7[%c0_15, %c0_16] : memref<8x1xf32, #tpu.memory_space<vmem>>, vector<8x1xf32>
    tpu.vector_store %arg7[%c0_15, %c0_16], %33 {strides = array<i32>} : memref<8x1xf32, #tpu.memory_space<vmem>>, vector<8x1xf32>,
    %c0_17 = arith.constant 0 : index
    %c0_18 = arith.constant 0 : index
    %35 = vector.load %arg6[%c0_17, %c0_18] : memref<8x1xf32, #tpu.memory_space<vmem>>, vector<8x1xf32>
    tpu.vector_store %arg6[%c0_17, %c0_18], %23 {strides = array<i32>} : memref<8x1xf32, #tpu.memory_space<vmem>>, vector<8x1xf32>,
    %c0_i32_19 = arith.constant 0 : i32
    %36 = arith.cmpi eq, %arg1, %c0_i32_19 : i32
    %37 = arith.extui %36 : i1 to i32
    %c0_i32_20 = arith.constant 0 : i32
    %38 = arith.cmpi ne, %37, %c0_i32_20 : i32
    scf.if %38 {
      %c0_21 = arith.constant 0 : index
      %c0_22 = arith.constant 0 : index
      %39 = vector.load %arg6[%c0_21, %c0_22] : memref<8x1xf32, #tpu.memory_space<vmem>>, vector<8x1xf32>
      %c0_23 = arith.constant 0 : index
      %c0_24 = arith.constant 0 : index
      %40 = vector.load %arg7[%c0_23, %c0_24] : memref<8x1xf32, #tpu.memory_space<vmem>>, vector<8x1xf32>
      %41 = math.log %40 : vector<8x1xf32>
      %42 = arith.addf %39, %41 : vector<8x1xf32>
      %c0_25 = arith.constant 0 : index
      %c0_26 = arith.constant 0 : index
      %43 = vector.load %arg8[%c0_25, %c0_26] : memref<8x1xf32, #tpu.memory_space<vmem>>, vector<8x1xf32>
      %44 = arith.subf %42, %43 : vector<8x1xf32>
      %c0_27 = arith.constant 0 : index
      %c0_28 = arith.constant 0 : index
      %45 = vector.load %arg4[%c0_27, %c0_28] : memref<8x1xf32, #tpu.memory_space<vmem>>, vector<8x1xf32>
      tpu.vector_store %arg4[%c0_27, %c0_28], %44 {strides = array<i32>} : memref<8x1xf32, #tpu.memory_space<vmem>>, vector<8x1xf32>,
    } else {
    }
    return
  }
  func.func @transform_0(%arg0: i32, %arg1: i32) -> (i32, i32) {
    %c0_i32 = arith.constant 0 : i32
    %c0_i32_0 = arith.constant 0 : i32
    return %arg0, %c0_i32 : i32, i32
  }
  func.func @transform_1(%arg0: i32, %arg1: i32) -> (i32, i32) {
    %c0_i32 = arith.constant 0 : i32
    %c0_i32_0 = arith.constant 0 : i32
    return %arg1, %c0_i32 : i32, i32
  }
  func.func @transform_2(%arg0: i32, %arg1: i32) -> (i32, i32) {
    %c0_i32 = arith.constant 0 : i32
    %c0_i32_0 = arith.constant 0 : i32
    return %arg0, %c0_i32 : i32, i32
  }
}

</mosaic_0001>

<llo_original>
// kernel: tpu_custom_call.1
$region0: #{tpu_custom_call.1}
  #allocation0 [shape = 'u32[]', space=smem, size = 0x4, offset = 0x4, fixed_abs, tag = 'smem constant byte address 0x4 - core index']
  #allocation1 [shape = 'u32[144,128]{1,0:T(1,128)}', space=vmem, size = 0x12000, scoped, tag = 'internal scratch']
  #allocation2 [shape = 'f32[8,1]{1,0:T(8,128)}', space=vmem, size = 0x1000, scoped, tag = 'scratch operand']
  #allocation3 [shape = 'f32[8,1]{1,0:T(8,128)}', space=vmem, size = 0x1000, scoped, tag = 'scratch operand']
  #allocation4 [shape = 'f32[8,1]{1,0:T(8,128)}', space=vmem, size = 0x1000, scoped, tag = 'scratch operand']
  #allocation5 [shape = 'f32[8,1]{1,0:T(8,128)}', space=vmem, size = 0x1000, scoped, tag = 'scratch operand']
  %s0 = inlined_call_operand.hbm [shape: f32[8,128], index: 0, kind: input, shape index: {}]
  %s1 = inlined_call_operand.hbm [shape: f32[8,128], index: 1, kind: input, shape index: {}]
  %s2 = inlined_call_operand.vmem [shape: f32[8,1], index: 2, kind: output, shape index: {}]
  %s3 = sld [smem:[#allocation0]]
  $region38: #{tpu_custom_call.1} parent=0
    _
  %s5 = ssub.s32 1, %s3
  %s6 = scalar_select 0, %s5, %s3
  $region1: #{tpu_custom_call.1} parent=0
    #allocation6 [shape = 'u8[4096]{0}', space=vmem, size = 0x1000, scoped, tag = 'input window, operand 0, single buffered']
    #allocation7 [shape = 's32[1]{0}', space=sflag, size = 0x4, scoped, tag = 'scoped memory for tpu_custom_call.1']
    #allocation8 [shape = 'u8[4096]{0}', space=vmem, size = 0x1000, scoped, tag = 'input window, operand 1, single buffered']
    #allocation9 [shape = 's32[1]{0}', space=sflag, size = 0x4, scoped, tag = 'scoped memory for tpu_custom_call.1']
    %7 = vsyncpa [#allocation7], 0
    %8 = vsyncpa [#allocation9], 0
    // Predicated region
    $region2: #{tpu_custom_call.1} parent=1 // pred_check
      _
    $region3: #{tpu_custom_call.1} parent=1 // pred_check_branch
      %10 = sbr.rel (0) target = $region5
    $region4: #{tpu_custom_call.1} parent=1 // pred_region
      %s12 = ssub.s32 128, 128
      %13 = vsyncadd [#allocation7], %s12
      %s15 = sshll.u32 [#allocation6], 4
      %s16 = int_to_ptr.vmem [resolvable:$true] %s15
      %18 = dma.hbm_to_vmem [thread:$0]  %s0, 128, %s16, [#allocation7]
    $region5: #{tpu_custom_call.1} parent=1 // pred_fallthru
      _
    // Predicated region
    $region6: #{tpu_custom_call.1} parent=1 // pred_check
      _
    $region7: #{tpu_custom_call.1} parent=1 // pred_check_branch
      %20 = sbr.rel (0) target = $region9
    $region8: #{tpu_custom_call.1} parent=1 // pred_region
      %s22 = ssub.s32 128, 128
      %23 = vsyncadd [#allocation9], %s22
      %s25 = sshll.u32 [#allocation8], 4
      %s26 = int_to_ptr.vmem [resolvable:$true] %s25
      %28 = dma.hbm_to_vmem [thread:$0]  %s1, 128, %s26, [#allocation9]
    $region9: #{tpu_custom_call.1} parent=1 // pred_fallthru
      _
    // Predicated region
    $region10: #{tpu_custom_call.1} parent=1 // pred_check
      _
    $region11: #{tpu_custom_call.1} parent=1 // pred_check_branch
      %30 = sbr.rel (0) target = $region13
    $region12: #{tpu_custom_call.1} parent=1 // pred_region
      %31 = dma.done [#allocation7], 128
    $region13: #{tpu_custom_call.1} parent=1 // pred_fallthru
      _
    // Predicated region
    $region14: #{tpu_custom_call.1} parent=1 // pred_check
      _
    $region15: #{tpu_custom_call.1} parent=1 // pred_check_branch
      %33 = sbr.rel (0) target = $region17
    $region16: #{tpu_custom_call.1} parent=1 // pred_region
      %34 = dma.done [#allocation9], 128
    $region17: #{tpu_custom_call.1} parent=1 // pred_fallthru
      _
    %v35 = vld [vmem:[#allocation6] sm:$0xff]
    %v36 = vld [vmem:[#allocation8] sm:$0xff]
    %v37 = vmul.f32 %v36, %v36
    %38 = vadd.xlane.f32.xlu0 %v37
    %v39 = vpop.xlane.xlu0 %38
    %v40 = vmax.f32 %v39, 1e-24
    %v41 = vrsqrt.pop %v40
    %v42 = vmul.f32 %v36, %v41
    %p43 = scmp.eq.s32.totalorder 0, 0
    // Predicated region
    $region18: #{tpu_custom_call.1} parent=1 // pred_check
      %p44 = pneg %p43
    $region19: #{tpu_custom_call.1} parent=1 // pred_check_branch
      %46 = sbr.rel (%p44) target = $region21
    $region20: #{tpu_custom_call.1} parent=1 // pred_region
      %v47 = vmul.f32 %v35, %v35
      %48 = vadd.xlane.f32.xlu0 %v47
      %v49 = vpop.xlane.xlu0 %48
      %v50 = vmax.f32 %v49, 1e-24
      %v51 = vrsqrt.pop %v50
      %v52 = vmul.f32 %v51, 2.0
      %vm53 = vcmask 7168
      %54 = vst.msk [vmem:[#allocation2] sm:$0xff] %vm53, %v52
      %55 = vst.msk [vmem:[#allocation3] sm:$0xff] %vm53, -1e+30
      %56 = vst.msk [vmem:[#allocation4] sm:$0xff] %vm53, 0.0
      %57 = vst.msk [vmem:[#allocation5] sm:$0xff] %vm53, 0.0
    $region21: #{tpu_custom_call.1} parent=1 // pred_fallthru
      _
    %58 = vmatprep.subr.mxu0 0.0
    %59 = vmatpush1.xpose.msra.mxu0 %v42
    %60 = vmatprep.subr.mxu0 0.0
    %61 = vmatpush1.xpose.msra.mxu0 0.0
    %62 = vmatprep.subr.mxu0 0.0
    %63 = vmatpush1.xpose.msra.mxu0 0.0
    %64 = vmatprep.subr.mxu0 0.0
    %65 = vmatpush1.xpose.msra.mxu0 0.0
    %66 = vmatprep.subr.mxu0 0.0
    %67 = vmatpush1.xpose.msra.mxu0 0.0
    %68 = vmatprep.subr.mxu0 0.0
    %69 = vmatpush1.xpose.msra.mxu0 0.0
    %70 = vmatprep.subr.mxu0 0.0
    %71 = vmatpush1.xpose.msra.mxu0 0.0
    %72 = vmatprep.subr.mxu0 0.0
    %73 = vmatpush1.xpose.msra.mxu0 0.0
    %74 = vmatprep.subr.mxu0 0.0
    %75 = vmatpush1.xpose.msra.mxu0 0.0
    %76 = vmatprep.subr.mxu0 0.0
    %77 = vmatpush1.xpose.msra.mxu0 0.0
    %78 = vmatprep.subr.mxu0 0.0
    %79 = vmatpush1.xpose.msra.mxu0 0.0
    %80 = vmatprep.subr.mxu0 0.0
    %81 = vmatpush1.xpose.msra.mxu0 0.0
    %82 = vmatprep.subr.mxu0 0.0
    %83 = vmatpush1.xpose.msra.mxu0 0.0
    %84 = vmatprep.subr.mxu0 0.0
    %85 = vmatpush1.xpose.msra.mxu0 0.0
    %86 = vmatprep.subr.mxu0 0.0
    %87 = vmatpush1.xpose.msra.mxu0 0.0
    %88 = vmatprep.subr.mxu0 0.0
    %89 = vmatpush1.xpose.msra.mxu0 0.0
    %90 = vmatprep.subr.mxu0 0.0
    %91 = vmatpush1.xpose.msra.mxu0 0.0
    %92 = vmatprep.subr.mxu0 0.0
    %93 = vmatpush1.xpose.msra.mxu0 0.0
    %94 = vmatprep.subr.mxu0 0.0
    %95 = vmatpush1.xpose.msra.mxu0 0.0
    %96 = vmatprep.subr.mxu0 0.0
    %97 = vmatpush1.xpose.msra.mxu0 0.0
    %98 = vmatprep.subr.mxu0 0.0
    %99 = vmatpush1.xpose.msra.mxu0 0.0
    %100 = vmatprep.subr.mxu0 0.0
    %101 = vmatpush1.xpose.msra.mxu0 0.0
    %102 = vmatprep.subr.mxu0 0.0
    %103 = vmatpush1.xpose.msra.mxu0 0.0
    %104 = vmatprep.subr.mxu0 0.0
    %105 = vmatpush1.xpose.msra.mxu0 0.0
    %106 = vmatprep.subr.mxu0 0.0
    %107 = vmatpush1.xpose.msra.mxu0 0.0
    %108 = vmatprep.subr.mxu0 0.0
    %109 = vmatpush1.xpose.msra.mxu0 0.0
    %110 = vmatprep.subr.mxu0 0.0
    %111 = vmatpush1.xpose.msra.mxu0 0.0
    %112 = vmatprep.subr.mxu0 0.0
    %113 = vmatpush1.xpose.msra.mxu0 0.0
    %114 = vmatprep.subr.mxu0 0.0
    %115 = vmatpush1.xpose.msra.mxu0 0.0
    %116 = vmatprep.subr.mxu0 0.0
    %117 = vmatpush1.xpose.msra.mxu0 0.0
    %118 = vmatprep.subr.mxu0 0.0
    %119 = vmatpush1.xpose.msra.mxu0 0.0
    %120 = vmatprep.subr.mxu0 0.0
    %121 = vmatpush1.xpose.msra.mxu0 0.0
    %122 = vmatprep.mubr.f32.mxu0 0.0
    %123 = vmatmul.mubr.f32.gmra.mrb[0].mxu0 %v35
    %v124 = vpop.f32.mrb[0].mxu0
    %v125 = vadd.f32 0.0, %v124
    %v126 = vpop.f32.mrb[0].mxu0
    %127 = vdwg.mxu0
    %v128 = vld [vmem:[#allocation2] sm:$0xff]
    %130 = vset.pattern.permute.xlu0 0
    %131 = vperm.xlu0 %130, %v128
    %v132 = vpop.permute.xlu0 %131
    %v134 = vmul.f32 %v125, %v132
    %p135 = scmp.eq.s32.totalorder 0, 0
    // Predicated region
    $region22: #{tpu_custom_call.1} parent=1 // pred_check
      %p136 = pneg %p135
    $region23: #{tpu_custom_call.1} parent=1 // pred_check_branch
      %138 = sbr.rel (%p136) target = $region25
    $region24: #{tpu_custom_call.1} parent=1 // pred_region
      %v139 = vlaneseq
      %v140 = vshrl.u32 %v139, 7
      %v141 = vlaneseq
      %v142 = vand.u32 %v141, 127
      %vm143 = vcmp.eq.s32.totalorder %v140, %v142
      %v144 = vsel %vm143, %v134, 0.0
      %vm145 = vcmask 64512
      %v146 = vsel %vm145, %v144, 0.0
      %147 = vadd.xlane.f32.xlu0 %v146
      %v148 = vpop.xlane.xlu0 %147
      %vm149 = vcmask 7168
      %150 = vst.msk [vmem:[#allocation5] sm:$0xff] %vm149, %v148
    $region25: #{tpu_custom_call.1} parent=1 // pred_fallthru
      _
    %v151 = vld [vmem:[#allocation3] sm:$0xff]
    %vm152 = vcmask 64512
    %v153 = vsel %vm152, %v134, -inf
    %154 = vmax.xlane.f32.xlu0 %v153
    %v155 = vpop.xlane.xlu0 %154
    %v156 = vmax.f32 %v151, %v155
    %v157 = vsub.f32 %v151, %v156
    %v158 = vmul.f32 %v157, 1.442695
    %v159 = vpow.pop %v158
    %161 = vset.pattern.permute.xlu0 0
    %162 = vperm.xlu0 %161, %v156
    %v163 = vpop.permute.xlu0 %162
    %v165 = vsub.f32 %v134, %v163
    %v166 = vmul.f32 %v165, 1.442695
    %v167 = vpow.pop %v166
    %v168 = vld [vmem:[#allocation4] sm:$0xff]
    %v169 = vmul.f32 %v159, %v168
    %v170 = vsel %vm152, %v167, 0.0
    %171 = vadd.xlane.f32.xlu0 %v170
    %v172 = vpop.xlane.xlu0 %171
    %v173 = vadd.f32 %v169, %v172
    %vm174 = vcmask 7168
    %175 = vst.msk [vmem:[#allocation4] sm:$0xff] %vm174, %v173
    %176 = vst.msk [vmem:[#allocation3] sm:$0xff] %vm174, %v156
    // Predicated region
    $region26: #{tpu_custom_call.1} parent=1 // pred_check
      %p177 = pneg %p43
    $region27: #{tpu_custom_call.1} parent=1 // pred_check_branch
      %179 = sbr.rel (%p177) target = $region29
    $region28: #{tpu_custom_call.1} parent=1 // pred_region
      %v180 = vld [vmem:[#allocation3] sm:$0xff]
      %v181 = vld [vmem:[#allocation4] sm:$0xff]
      %v182 = vlog2.pop %v181
      %v183 = vmul.f32 %v182, 0.6931472
      %v184 = vadd.f32 %v180, %v183
      %v185 = vld [vmem:[#allocation5] sm:$0xff]
      %v186 = vsub.f32 %v184, %v185
      %187 = vst.msk [vmem:[%s2] sm:$0xff] %vm174, %v186
    $region29: #{tpu_custom_call.1} parent=1 // pred_fallthru
      _
    // Predicated region
    $region30: #{tpu_custom_call.1} parent=1 // pred_check
      _
    $region31: #{tpu_custom_call.1} parent=1 // pred_check_branch
      %189 = sbr.rel (0) target = $region33
    $region32: #{tpu_custom_call.1} parent=1 // pred_region
      _
    $region33: #{tpu_custom_call.1} parent=1 // pred_fallthru
      _
    // Predicated region
    $region34: #{tpu_custom_call.1} parent=1 // pred_check
      _
    $region35: #{tpu_custom_call.1} parent=1 // pred_check_branch
      %191 = sbr.rel (0) target = $region37
    $region36: #{tpu_custom_call.1} parent=1 // pred_region
      _
    $region37: #{tpu_custom_call.1} parent=1 // pred_fallthru
      _
    %192 = vsyncpa [#allocation7], 1
    %193 = vsyncpa [#allocation9], 1

</llo_original>
